<compile_context>
chip_gen: v6e
topology: v6e:2x2x1
jax: 0.10.0
libtpu: 0.0.40
codegen_flags: <defaults>
</compile_context>

<pallas_src>
import functools

import numpy as np
import jax
import jax.numpy as jnp
from jax import lax
from jax.experimental import pallas as pl
from jax.experimental.pallas import tpu as pltpu


# --------------------------------------------------------------------------
# Order-independent precompute (host-side numpy): eigenvector basis of the
# DFT-commuting matrix S.  TODO(synk): np.linalg.eigh has no Pallas
# equivalent; this N x N precompute depends neither on the data nor on the
# learnable 'order' parameter, so it stays on the host (cached per N).
# --------------------------------------------------------------------------
def _dfrft_eigvecs_np(N: int) -> np.ndarray:
    assert N >= 3, "DFrFT eigenbasis construction assumes N >= 3"
    s = np.zeros(N, dtype=np.float64)
    s[1] = 1.0
    s[N - 1] += 1.0
    n = np.arange(N)
    S = s[(n[:, None] - n[None, :]) % N] + np.diag(np.real(np.fft.fft(s)))

    # Even/odd decomposition matrix P (symmetric, orthogonal).
    P = np.zeros((N, N), dtype=np.float64)
    r = N // 2
    even = 1 if N % 2 == 0 else 0
    isq2 = 1.0 / np.sqrt(2.0)
    P[0, 0] = 1.0
    for i in range(1, r - even + 1):
        P[i, i] = isq2
        P[i, N - i] = isq2
    if even:
        P[r, r] = 1.0
    for i in range(r + 1, N):
        P[i, i] = -isq2
        P[i, N - i] = isq2

    CS = P @ S @ P.T
    n_even = N // 2 + 1
    n_odd = N - n_even
    C2 = CS[:n_even, :n_even]
    S2 = CS[n_even:, n_even:]
    ec, vc = np.linalg.eigh(C2)
    es, vs = np.linalg.eigh(S2)
    vc = vc[:, np.argsort(-ec)]  # descending -> Hermite orders 0, 2, 4, ...
    vs = vs[:, np.argsort(-es)]  # descending -> Hermite orders 1, 3, 5, ...

    qvc = np.concatenate([vc, np.zeros((n_odd, n_even))], axis=0)
    qvs = np.concatenate([np.zeros((n_even, n_odd)), vs], axis=0)
    SC2 = P @ qvc  # (N, n_even) even eigenvectors of S
    SS2 = P @ qvs  # (N, n_odd)  odd eigenvectors of S

    if N % 2 == 0:
        E = np.zeros((N, N + 1))
        E[:, 0::2] = SC2
        E[:, 1::2] = np.concatenate([SS2, np.zeros((N, 1))], axis=1)
        E = np.delete(E, N - 1, axis=1)  # drop the zero-padded odd slot
    else:
        E = np.zeros((N, N))
        E[:, 0::2] = SC2
        E[:, 1::2] = SS2
    return E.astype(np.float32)


@functools.lru_cache(maxsize=None)
def _dfrft_eigvecs_cached(N: int) -> np.ndarray:
    return _dfrft_eigvecs_np(N)


def _dfrft_index_np(N: int) -> np.ndarray:
    shift = 1 - (N % 2)
    return np.concatenate([np.arange(N - 1), [N - 1 + shift]]).astype(np.float32)


# --------------------------------------------------------------------------
# Small helpers
# --------------------------------------------------------------------------
def _cdiv(a: int, b: int) -> int:
    return -(-a // b)


def _round_up(a: int, b: int) -> int:
    return _cdiv(a, b) * b


_HW_CONFIG = None


def _hw():
    """(vmem_budget, vmem_limit, assumed_tensorcores), generation-aware."""
    global _HW_CONFIG
    if _HW_CONFIG is None:
        cap = 64 * 1024 * 1024
        try:
            cap = int(pltpu.get_tpu_info().vmem_capacity_bytes)
        except Exception:
            pass
        cap = max(cap, 32 * 1024 * 1024)
        vmem_limit = int(min(cap * 0.80, cap - (8 << 20)))   # headroom for Mosaic scratch
        budget = int(cap * 0.60)
        # v7x-like chips report <=64 MiB VMEM and have 2 TensorCores; v5e/v6e
        # report 128 MiB and have 1 TensorCore.
        cores = 2 if cap <= (64 << 20) else 1
        _HW_CONFIG = (budget, vmem_limit, cores)
    return _HW_CONFIG


_SINGLE_BUF_OK = None


def _probe_single_buffer() -> bool:
    """Probe once whether pipeline_mode=pl.Buffered(1) lowers on this stack."""
    global _SINGLE_BUF_OK
    if _SINGLE_BUF_OK is None:
        try:
            def _pk(a_ref, o_ref):
                o_ref[...] = a_ref[...] * 2.0

            spec = pl.BlockSpec((8, 128), lambda i: (0, 0),
                                pipeline_mode=pl.Buffered(1))
            fn = pl.pallas_call(
                _pk,
                out_shape=jax.ShapeDtypeStruct((16, 128), jnp.float32),
                grid_spec=pltpu.PrefetchScalarGridSpec(
                    num_scalar_prefetch=0, grid=(2,),
                    in_specs=[spec],
                    out_specs=pl.BlockSpec((8, 128), lambda i: (i, 0))),
            )
            jax.block_until_ready(fn(jnp.ones((8, 128), jnp.float32)))
            _SINGLE_BUF_OK = True
        except Exception:
            _SINGLE_BUF_OK = False
    return _SINGLE_BUF_OK


# --------------------------------------------------------------------------
# Kernel bodies: one fused MXU matmul per grid step, f32 accumulation.
# --------------------------------------------------------------------------
def _row_kernel(x_ref, w_ref, o_ref):
    o_ref[...] = jnp.dot(x_ref[...], w_ref[...],
                         preferred_element_type=jnp.float32)


def _col_kernel(w_ref, x_ref, o_ref):
    # out(2N, TC) = W(2N, N) @ x(TC, N)^T : contract dim 1 of both operands so
    # the batch tile never needs a materialized transpose in HBM.
    o_ref[...] = lax.dot_general(
        w_ref[...], x_ref[...],
        dimension_numbers=(((1,), (1,)), ((), ())),
        preferred_element_type=jnp.float32)


# --------------------------------------------------------------------------
# Tile selection (VMEM-budget and generation aware).
# --------------------------------------------------------------------------
def _choose_row_tile(M, N, tn, itemsize, budget, cores, w_buffers, align):
    w_bytes = w_buffers * N * tn * itemsize
    per_row = 2 * (N * itemsize + tn * 4)          # dbl-buffered x row + f32 out row
    cap = (budget - w_bytes) // max(per_row, 1)
    cap = max(align, (cap // align) * align)
    if cores > 1:
        # >= 2*cores grid steps so both TensorCores get work and can still
        # pipeline DMA against compute (v7x megacore).
        tm = min(_round_up(max(_cdiv(M, 2 * cores), 1), align), 512)
    else:
        # Single TensorCore (v5e/v6e): biggest tile that fits.
        tm = min(_round_up(M, align), 1024)
    return max(align, min(tm, cap))


def _choose_col_tile(M, N, itemsize, budget, cores):
    w_bytes = 2 * (2 * N) * N * itemsize
    per_col = 2 * (N * itemsize + 2 * N * 4)
    cap = (budget - w_bytes) // max(per_col, 1)
    cap = max(128, (cap // 128) * 128)
    if cores > 1:
        tc = min(_round_up(max(_cdiv(M, 2 * cores), 1), 128), 1024)
    else:
        tc = min(_round_up(M, 128), 2048)
    return max(128, min(tc, cap))


# --------------------------------------------------------------------------
# pallas_call wrappers for the two orientations.
# --------------------------------------------------------------------------
def _row_matmul(x2, w, *, budget, cores, vmem_limit):
    Mr, N = x2.shape
    n_out = w.shape[1]                       # 2N
    itemsize = jnp.dtype(x2.dtype).itemsize
    align = 16 if itemsize < 4 else 8
    w_bytes = N * n_out * itemsize

    if 2 * w_bytes <= budget // 2:
        # Full fused weight stays resident.  Single-buffer it (its index map
        # is constant) when it is big enough to matter and Buffered(1) works.
        tn = n_out
        single_w = w_bytes >= (2 << 20) and _probe_single_buffer()
        w_buffers = 1 if single_w else 2
    elif w_bytes <= budget // 2 and _probe_single_buffer():
        tn, w_buffers, single_w = n_out, 1, True
    else:
        # Weight too large to stay resident: tile its output columns so the
        # kernel scales to arbitrary N (TN <= 512, shrink until it fits).
        single_w = False
        w_buffers = 2
        tn = 512
        while tn > 128 and w_buffers * N * tn * itemsize > budget // 2:
            tn //= 2
        # TODO(synk): for N so large that even (N, 128) weight tiles overflow
        # VMEM, a K-tiled accumulator grid would be needed.

    tm = _choose_row_tile(Mr, N, tn, itemsize, budget, cores, w_buffers, align)
    grid = (_cdiv(Mr, tm), _cdiv(n_out, tn))

    if single_w:
        w_spec = pl.BlockSpec((N, tn), lambda i, j: (0, j),
                              pipeline_mode=pl.Buffered(1))
    else:
        w_spec = pl.BlockSpec((N, tn), lambda i, j: (0, j))

    return pl.pallas_call(
        _row_kernel,
        out_shape=jax.ShapeDtypeStruct((Mr, n_out), jnp.float32),
        grid_spec=pltpu.PrefetchScalarGridSpec(
            num_scalar_prefetch=0, grid=grid,
            in_specs=[pl.BlockSpec((tm, N), lambda i, j: (i, 0)), w_spec],
            out_specs=pl.BlockSpec((tm, tn), lambda i, j: (i, j))),
        compiler_params=pltpu.CompilerParams(
            dimension_semantics=("parallel", "parallel"),
            vmem_limit_bytes=vmem_limit),
    )(x2, w)


def _col_matmul(x2, w, *, budget, cores, vmem_limit):
    Mr, N = x2.shape
    two_n = w.shape[0]
    itemsize = jnp.dtype(x2.dtype).itemsize
    tc = _choose_col_tile(Mr, N, itemsize, budget, cores)
    grid = (_cdiv(Mr, tc),)
    return pl.pallas_call(
        _col_kernel,
        out_shape=jax.ShapeDtypeStruct((two_n, Mr), jnp.float32),
        grid_spec=pltpu.PrefetchScalarGridSpec(
            num_scalar_prefetch=0, grid=grid,
            in_specs=[pl.BlockSpec((two_n, N), lambda j: (0, 0)),   # tiny weight
                      pl.BlockSpec((tc, N), lambda j: (j, 0))],     # batch tile
            out_specs=pl.BlockSpec((two_n, tc), lambda j: (0, j))),
        compiler_params=pltpu.CompilerParams(
            dimension_semantics=("parallel",),
            vmem_limit_bytes=vmem_limit),
    )(w, x2)


# --------------------------------------------------------------------------
# Fused DFrFT weight (order-dependent, data-independent): built with ONE
# (N,N)@(N,2N) matmul in the XLA wrapper.
# --------------------------------------------------------------------------
def _dfrft_weight(order, N: int, layout: str) -> jax.Array:
    E = jnp.asarray(_dfrft_eigvecs_cached(N))            # (N, N) float32
    idx = jnp.asarray(_dfrft_index_np(N))                # (N,) small integers
    # phase = -order*(pi/2)*idx; reduce (order*idx) mod 4 before cos/sin so
    # large-N phases keep float32 precision.
    t = jnp.asarray(order, jnp.float32) * idx
    t = t - 4.0 * jnp.floor(t * 0.25)
    ang = -(jnp.pi / 2.0) * t
    c, s = jnp.cos(ang), jnp.sin(ang)
    if layout == "row":      # (N, 2N) = E @ [diag(c) E^T | diag(s) E^T]
        return E @ jnp.concatenate([c[:, None] * E.T, s[:, None] * E.T], axis=1)
    else:                    # (2N, N) = [E diag(c) ; E diag(s)] @ E^T
        return jnp.concatenate([E * c[None, :], E * s[None, :]], axis=0) @ E.T


# --------------------------------------------------------------------------
# Public entry point.
# --------------------------------------------------------------------------
def dfrft_pallas(x: jax.Array, order, *, dim: int = -1,
                 compute_dtype=None) -> jax.Array:
    """out = einsum('zy,...y->...z', F_a, x) with F_a the NxN DFrFT matrix.

    compute_dtype: None -> auto (bfloat16 operands with f32 accumulation when
    N >= 256, float32 otherwise); pass jnp.float32 to force full precision.
    """
    x = jnp.asarray(x)
    is_cplx = jnp.issubdtype(x.dtype, jnp.complexfloating)
    x = x.astype(jnp.complex64 if is_cplx else jnp.float32)

    xm = jnp.moveaxis(x, dim, -1)
    lead = xm.shape[:-1]
    N = xm.shape[-1]
    M = int(np.prod(lead)) if lead else 1
    xf = xm.reshape(M, N)
    if is_cplx:
        # Complex input: stack real/imag rows and recombine after the real
        # matmuls (matches torch's complex64 semantics).
        x2 = jnp.concatenate([jnp.real(xf), jnp.imag(xf)], axis=0)    # (2M, N)
    else:
        x2 = xf

    if compute_dtype is None:
        compute_dtype = jnp.bfloat16 if N >= 256 else jnp.float32
    in_dtype = jnp.dtype(compute_dtype)

    budget, vmem_limit, cores = _hw()
    use_col = (2 * N) < 128

    if use_col:
        # Small transform axis: (2N, TC) output so the batch rides the
        # 128-lane axis -> unmasked full-width stores.
        w = _dfrft_weight(order, N, "col").astype(in_dtype)           # (2N, N)
        out = _col_matmul(x2.astype(in_dtype), w,
                          budget=budget, cores=cores, vmem_limit=vmem_limit)
        if is_cplx:
            re_t = out[:N, :M] - out[N:, M:]
            im_t = out[N:, :M] + out[:N, M:]
        else:
            re_t, im_t = out[:N], out[N:]
        cplx = lax.complex(re_t, im_t).T                              # (M, N)
    else:
        w = _dfrft_weight(order, N, "row").astype(in_dtype)           # (N, 2N)
        out = _row_matmul(x2.astype(in_dtype), w,
                          budget=budget, cores=cores, vmem_limit=vmem_limit)
        if is_cplx:
            re = out[:M, :N] - out[M:, N:]
            im = out[:M, N:] + out[M:, :N]
        else:
            re, im = out[:, :N], out[:, N:]
        # TODO(synk): Mosaic has no complex dtype; the re|im slab is turned
        # into complex64 by XLA (lax.complex on contiguous halves).
        cplx = lax.complex(re, im)                                    # (M, N)

    cplx = cplx.astype(jnp.complex64).reshape(lead + (N,))
    return jnp.moveaxis(cplx, -1, dim)


class DFrFTLayer:
    """JAX/Pallas port of torch_frft.layer.DFrFTLayer (forward pass)."""

    def __init__(self, order: float = 1.0, *, dim: int = -1,
                 compute_dtype=None) -> None:
        # The only parameter is a scalar 'order' (deterministic init).
        self.order = jnp.array(order, dtype=jnp.float32)
        self.dim = dim
        self.compute_dtype = compute_dtype

    def __repr__(self) -> str:
        return f"DFrFTLayer(order={float(self.order)}, dim={self.dim})"

    def __call__(self, x: jax.Array) -> jax.Array:
        return dfrft_pallas(x, self.order, dim=self.dim,
                            compute_dtype=self.compute_dtype)


# --------------------------------------------------------------------------
# Pure numpy (float64/complex128) reference of the same DFrFT definition.
# --------------------------------------------------------------------------
def _dfrft_reference_np(x, order: float) -> np.ndarray:
    N = x.shape[-1]
    E = _dfrft_eigvecs_np(N).astype(np.complex128)
    idx = _dfrft_index_np(N).astype(np.float64)
    evals = np.exp(-1j * float(order) * (np.pi / 2.0) * idx)
    F = E @ np.diag(evals) @ E.T
    return np.einsum("zy,...y->...z", F, np.asarray(x).astype(np.complex128))


if __name__ == "__main__":
    key = jax.random.PRNGKey(0)
    k1, k2, k3, k4, k5 = jax.random.split(key, 5)

    # 1) Small-N (NCHW, transform along W): lane-dense column orientation.
    x1 = jax.random.normal(k1, (2, 4, 16, 16), dtype=jnp.float32)
    layer1 = DFrFTLayer(order=1.25, dim=-1)
    y1 = jax.block_until_ready(layer1(x1))
    assert y1.shape == x1.shape and y1.dtype == jnp.complex64
    np.testing.assert_allclose(np.asarray(y1),
                               _dfrft_reference_np(np.asarray(x1), 1.25),
                               atol=1e-2, rtol=1e-2)

    # 2) Larger-N row orientation (partial M tile, no padding copies).
    x2 = jax.random.normal(k2, (2, 3, 128), dtype=jnp.float32)
    layer2 = DFrFTLayer(order=0.6, dim=-1)
    y2 = jax.block_until_ready(layer2(x2))
    assert y2.shape == x2.shape and y2.dtype == jnp.complex64
    np.testing.assert_allclose(np.asarray(y2),
                               _dfrft_reference_np(np.asarray(x2), 0.6),
                               atol=1e-2, rtol=1e-2)

    # 3) Complex input, column orientation, ragged batch (masked tail tiles).
    x3 = (jax.random.normal(k3, (3, 5, 16))
          + 1j * jax.random.normal(k4, (3, 5, 16))).astype(jnp.complex64)
    layer3 = DFrFTLayer(order=0.8, dim=-1)
    y3 = jax.block_until_ready(layer3(x3))
    assert y3.shape == x3.shape and y3.dtype == jnp.complex64
    np.testing.assert_allclose(np.asarray(y3),
                               _dfrft_reference_np(np.asarray(x3), 0.8),
                               atol=1e-2, rtol=1e-2)

    # 4) Complex input, row orientation.
    x4 = (jax.random.normal(k5, (2, 3, 96))
          + 1j * jax.random.normal(k1, (2, 3, 96))).astype(jnp.complex64)
    layer4 = DFrFTLayer(order=1.7, dim=-1)
    y4 = jax.block_until_ready(layer4(x4))
    assert y4.shape == x4.shape and y4.dtype == jnp.complex64
    np.testing.assert_allclose(np.asarray(y4),
                               _dfrft_reference_np(np.asarray(x4), 1.7),
                               atol=1e-2, rtol=1e-2)

    print("KERNEL_OK")
</pallas_src>

<mosaic_0001>
module attributes {stable_mosaic.version = 11 : i64} {
  func.func @_col_kernel(%arg0: i32, %arg1: memref<32x16xf32, #tpu.memory_space<vmem>>, %arg2: memref<128x16xf32, #tpu.memory_space<vmem>>, %arg3: memref<32x128xf32, #tpu.memory_space<vmem>>) attributes {dimension_semantics = [#tpu.dimension_semantics<parallel>], iteration_bounds = array<i64: 1>, scalar_prefetch = 0 : i64, scratch_operands = 0 : i64, tpu.core_type = #tpu.core_type<tc>, window_params = [{pipeline_mode = #tpu.pipeline_mode<synchronous>, transform_indices = @transform_0, window_bounds = array<i64: 32, 16>}, {transform_indices = @transform_1, window_bounds = array<i64: 128, 16>}, {transform_indices = @transform_2, window_bounds = array<i64: 32, 128>}]} {
    %c0 = arith.constant 0 : index
    %c0_0 = arith.constant 0 : index
    %0 = vector.load %arg1[%c0, %c0_0] : memref<32x16xf32, #tpu.memory_space<vmem>>, vector<32x16xf32>
    %c0_1 = arith.constant 0 : index
    %c0_2 = arith.constant 0 : index
    %1 = vector.load %arg2[%c0_1, %c0_2] : memref<128x16xf32, #tpu.memory_space<vmem>>, vector<128x16xf32>
    %cst = arith.constant dense<0.000000e+00> : vector<32x128xf32>
    %2 = tpu.matmul %0, %1, %cst {dimension_numbers = #tpu.dot_dimension_numbers<[1], [1], [0], [0], [0, 0, 1, 0], [], []>} : vector<32x16xf32>, vector<128x16xf32>, vector<32x128xf32> -> vector<32x128xf32>
    %c0_3 = arith.constant 0 : index
    %c0_4 = arith.constant 0 : index
    %3 = vector.load %arg3[%c0_3, %c0_4] : memref<32x128xf32, #tpu.memory_space<vmem>>, vector<32x128xf32>
    tpu.vector_store %arg3[%c0_3, %c0_4], %2 {strides = array<i32>} : memref<32x128xf32, #tpu.memory_space<vmem>>, vector<32x128xf32>,
    return
  }
  func.func @transform_0(%arg0: i32) -> (i32, i32) {
    %c0_i32 = arith.constant 0 : i32
    %c0_i32_0 = arith.constant 0 : i32
    %c0_i32_1 = arith.constant 0 : i32
    return %c0_i32, %c0_i32_0 : i32, i32
  }
  func.func @transform_1(%arg0: i32) -> (i32, i32) {
    %c0_i32 = arith.constant 0 : i32
    %c0_i32_0 = arith.constant 0 : i32
    return %arg0, %c0_i32 : i32, i32
  }
  func.func @transform_2(%arg0: i32) -> (i32, i32) {
    %c0_i32 = arith.constant 0 : i32
    %c0_i32_0 = arith.constant 0 : i32
    return %c0_i32, %arg0 : i32, i32
  }
}

</mosaic_0001>

<llo_original>
// kernel: tpu_custom_call.1
$region0: #{tpu_custom_call.1}
  #allocation0 [shape = 'u32[]', space=smem, size = 0x4, offset = 0x4, fixed_abs, tag = 'smem constant byte address 0x4 - core index']
  #allocation1 [shape = 'u32[144,128]{1,0:T(1,128)}', space=vmem, size = 0x12000, scoped, tag = 'internal scratch']
  %s0 = inlined_call_operand.vmem [shape: f32[32,16], index: 0, kind: input, shape index: {}]
  %s1 = inlined_call_operand.vmem [shape: f32[128,16], index: 1, kind: input, shape index: {}]
  %s2 = inlined_call_operand.hbm [shape: f32[32,128], index: 2, kind: output, shape index: {}]
  %s3 = sld [smem:[#allocation0]]
  $region18: #{tpu_custom_call.1} parent=0
    _
  %s5 = ssub.s32 1, %s3
  %s6 = scalar_select 0, %s5, %s3
  $region1: #{tpu_custom_call.1} parent=0
    #allocation2 [shape = 'u8[16384]{0}', space=vmem, size = 0x4000, scoped, tag = 'output window, operand 0, single buffered']
    #allocation3 [shape = 's32[1]{0}', space=sflag, size = 0x4, scoped, tag = 'scoped memory for tpu_custom_call.1']
    %7 = vsyncpa [#allocation3], 0
    // Predicated region
    $region2: #{tpu_custom_call.1} parent=1 // pred_check
      _
    $region3: #{tpu_custom_call.1} parent=1 // pred_check_branch
      %9 = sbr.rel (0) target = $region5
    $region4: #{tpu_custom_call.1} parent=1 // pred_region
      _
    $region5: #{tpu_custom_call.1} parent=1 // pred_fallthru
      _
    // Predicated region
    $region6: #{tpu_custom_call.1} parent=1 // pred_check
      _
    $region7: #{tpu_custom_call.1} parent=1 // pred_check_branch
      %11 = sbr.rel (0) target = $region9
    $region8: #{tpu_custom_call.1} parent=1 // pred_region
      _
    $region9: #{tpu_custom_call.1} parent=1 // pred_fallthru
      _
    %v12 = vld [vmem:[%s0] sm:$0xff]
    %v13 = vld [vmem:[%s0 + $0x8] sm:$0xff]
    %v14 = vld [vmem:[%s0 + $0x10] sm:$0xff]
    %v15 = vld [vmem:[%s0 + $0x18] sm:$0xff]
    %v16 = vld [vmem:[%s1] sm:$0xff]
    %v17 = vld [vmem:[%s1 + $0x8] sm:$0xff]
    %v18 = vld [vmem:[%s1 + $0x10] sm:$0xff]
    %v19 = vld [vmem:[%s1 + $0x18] sm:$0xff]
    %v20 = vld [vmem:[%s1 + $0x20] sm:$0xff]
    %v21 = vld [vmem:[%s1 + $0x28] sm:$0xff]
    %v22 = vld [vmem:[%s1 + $0x30] sm:$0xff]
    %v23 = vld [vmem:[%s1 + $0x38] sm:$0xff]
    %v24 = vld [vmem:[%s1 + $0x40] sm:$0xff]
    %v25 = vld [vmem:[%s1 + $0x48] sm:$0xff]
    %v26 = vld [vmem:[%s1 + $0x50] sm:$0xff]
    %v27 = vld [vmem:[%s1 + $0x58] sm:$0xff]
    %v28 = vld [vmem:[%s1 + $0x60] sm:$0xff]
    %v29 = vld [vmem:[%s1 + $0x68] sm:$0xff]
    %v30 = vld [vmem:[%s1 + $0x70] sm:$0xff]
    %v31 = vld [vmem:[%s1 + $0x78] sm:$0xff]
    %vm32 = vcmask 130048
    %v34 = vsel %vm32, %v12, 0
    %v37 = vsel %vm32, %v13, 0
    %v40 = vsel %vm32, %v14, 0
    %v43 = vsel %vm32, %v15, 0
    %v46 = vsel %vm32, %v16, 0
    %v49 = vsel %vm32, %v17, 0
    %v52 = vsel %vm32, %v18, 0
    %v55 = vsel %vm32, %v19, 0
    %v58 = vsel %vm32, %v20, 0
    %v61 = vsel %vm32, %v21, 0
    %v64 = vsel %vm32, %v22, 0
    %v67 = vsel %vm32, %v23, 0
    %v70 = vsel %vm32, %v24, 0
    %v73 = vsel %vm32, %v25, 0
    %v76 = vsel %vm32, %v26, 0
    %v79 = vsel %vm32, %v27, 0
    %v82 = vsel %vm32, %v28, 0
    %v85 = vsel %vm32, %v29, 0
    %v88 = vsel %vm32, %v30, 0
    %v91 = vsel %vm32, %v31, 0
    %93 = vmatprep.subr.mxu0 0.0
    %94 = vmatpush1.xpose.msra.mxu0 %v91
    %95 = vmatprep.subr.mxu0 0.0
    %96 = vmatpush1.xpose.msra.mxu0 %v88
    %97 = vmatprep.subr.mxu0 0.0
    %98 = vmatpush1.xpose.msra.mxu0 %v85
    %99 = vmatprep.subr.mxu0 0.0
    %100 = vmatpush1.xpose.msra.mxu0 %v82
    %101 = vmatprep.subr.mxu0 0.0
    %102 = vmatpush1.xpose.msra.mxu0 %v79
    %103 = vmatprep.subr.mxu0 0.0
    %104 = vmatpush1.xpose.msra.mxu0 %v76
    %105 = vmatprep.subr.mxu0 0.0
    %106 = vmatpush1.xpose.msra.mxu0 %v73
    %107 = vmatprep.subr.mxu0 0.0
    %108 = vmatpush1.xpose.msra.mxu0 %v70
    %109 = vmatprep.subr.mxu0 0.0
    %110 = vmatpush1.xpose.msra.mxu0 %v67
    %111 = vmatprep.subr.mxu0 0.0
    %112 = vmatpush1.xpose.msra.mxu0 %v64
    %113 = vmatprep.subr.mxu0 0.0
    %114 = vmatpush1.xpose.msra.mxu0 %v61
    %115 = vmatprep.subr.mxu0 0.0
    %116 = vmatpush1.xpose.msra.mxu0 %v58
    %117 = vmatprep.subr.mxu0 0.0
    %118 = vmatpush1.xpose.msra.mxu0 %v55
    %119 = vmatprep.subr.mxu0 0.0
    %120 = vmatpush1.xpose.msra.mxu0 %v52
    %121 = vmatprep.subr.mxu0 0.0
    %122 = vmatpush1.xpose.msra.mxu0 %v49
    %123 = vmatprep.subr.mxu0 0.0
    %124 = vmatpush1.xpose.msra.mxu0 %v46
    %125 = vmatprep.subr.mxu0 0.0
    %126 = vmatpush2.xpose.msra.mxu0 0.0
    %127 = vmatprep.subr.mxu0 0.0
    %128 = vmatpush2.xpose.msra.mxu0 0.0
    %129 = vmatprep.subr.mxu0 0.0
    %130 = vmatpush2.xpose.msra.mxu0 0.0
    %131 = vmatprep.subr.mxu0 0.0
    %132 = vmatpush2.xpose.msra.mxu0 0.0
    %133 = vmatprep.subr.mxu0 0.0
    %134 = vmatpush2.xpose.msra.mxu0 0.0
    %135 = vmatprep.subr.mxu0 0.0
    %136 = vmatpush2.xpose.msra.mxu0 0.0
    %137 = vmatprep.subr.mxu0 0.0
    %138 = vmatpush2.xpose.msra.mxu0 0.0
    %139 = vmatprep.subr.mxu0 0.0
    %140 = vmatpush2.xpose.msra.mxu0 0.0
    %141 = vmatprep.subr.mxu0 0.0
    %142 = vmatpush2.xpose.msra.mxu0 0.0
    %143 = vmatprep.subr.mxu0 0.0
    %144 = vmatpush2.xpose.msra.mxu0 0.0
    %145 = vmatprep.subr.mxu0 0.0
    %146 = vmatpush2.xpose.msra.mxu0 0.0
    %147 = vmatprep.subr.mxu0 0.0
    %148 = vmatpush2.xpose.msra.mxu0 0.0
    %149 = vmatprep.subr.mxu0 0.0
    %150 = vmatpush2.xpose.msra.mxu0 0.0
    %151 = vmatprep.subr.mxu0 0.0
    %152 = vmatpush2.xpose.msra.mxu0 0.0
    %153 = vmatprep.subr.mxu0 0.0
    %154 = vmatpush2.xpose.msra.mxu0 0.0
    %155 = vmatprep.subr.mxu0 0.0
    %156 = vmatpush2.xpose.msra.mxu0 0.0
    %157 = vmatprep.mubr.f32.mxu0 0.0
    %158 = vmatmul.mubr.f32.gmra.mxu0 %v34
    %v159 = vpop.f32.mrf.mxu0
    %v160 = vadd.f32 0.0, %v159
    %v161 = vpop.f32.mrf.mxu0
    %162 = vmatprep.mubr.f32.mxu0 0.0
    %163 = vmatmul.mubr.f32.gmra.mxu0 %v37
    %v164 = vpop.f32.mrf.mxu0
    %v165 = vadd.f32 0.0, %v164
    %v166 = vpop.f32.mrf.mxu0
    %167 = vmatprep.mubr.f32.mxu0 0.0
    %168 = vmatmul.mubr.f32.gmra.mxu0 %v40
    %v169 = vpop.f32.mrf.mxu0
    %v170 = vadd.f32 0.0, %v169
    %v171 = vpop.f32.mrf.mxu0
    %172 = vmatprep.mubr.f32.mxu0 0.0
    %173 = vmatmul.mubr.f32.gmra.mxu0 %v43
    %v174 = vpop.f32.mrf.mxu0
    %v175 = vadd.f32 0.0, %v174
    %v176 = vpop.f32.mrf.mxu0
    %177 = vdwg.mxu0
    %178 = vst [vmem:[#allocation2] sm:$0xff] %v160
    %179 = vst [vmem:[#allocation2 + $0x8] sm:$0xff] %v165
    %180 = vst [vmem:[#allocation2 + $0x10] sm:$0xff] %v170
    %181 = vst [vmem:[#allocation2 + $0x18] sm:$0xff] %v175
    // Predicated region
    $region10: #{tpu_custom_call.1} parent=1 // pred_check
      _
    $region11: #{tpu_custom_call.1} parent=1 // pred_check_branch
      %183 = sbr.rel (0) target = $region13
    $region12: #{tpu_custom_call.1} parent=1 // pred_region
      %s185 = ssub.s32 512, 512
      %186 = vsyncadd [#allocation3], %s185
      %s187 = sshll.u32 [#allocation2], 4
      %s188 = int_to_ptr.vmem [resolvable:$true] %s187
      %193 = dma.vmem_to_hbm [thread:$0]  %s188, 512, %s2, [#allocation3], 128, 128, 8
    $region13: #{tpu_custom_call.1} parent=1 // pred_fallthru
      _
    // Predicated region
    $region14: #{tpu_custom_call.1} parent=1 // pred_check
      _
    $region15: #{tpu_custom_call.1} parent=1 // pred_check_branch
      %195 = sbr.rel (0) target = $region17
    $region16: #{tpu_custom_call.1} parent=1 // pred_region
      %196 = dma.done [#allocation3], 512
    $region17: #{tpu_custom_call.1} parent=1 // pred_fallthru
      _
    %197 = vsyncpa [#allocation3], 1

</llo_original>
